<compile_context>
chip_gen: v5e
topology: v5e:2x2
jax: 0.10.0
libtpu: 0.0.40
codegen_flags: <defaults>
</compile_context>

<pallas_src>
import jax
import jax.numpy as jnp
from jax import lax
from jax.experimental import pallas as pl
from jax.experimental.pallas import tpu as pltpu

CONV_K = 7
CONV_STRIDE = 2
CONV_PAD = 3
POOL_K = 3
POOL_STRIDE = 2
POOL_PAD = 1
C_IN = 3
C_OUT = 64
BN_EPS = 1e-5
K_TAPS = CONV_K * CONV_K * C_IN          # 147 im2col features per output position
K_PAIR = 2 * K_TAPS                      # 294: two consecutive output positions per matmul row

MAX_TM_CONV = 4096   # conv row-tile cap; working set @4096 ~= 7 MiB (fits v5e's 16 MiB scoped VMEM)


def _round_up(x, m):
    return ((x + m - 1) // m) * m


# ---------------- Pallas kernels ----------------

def _conv_bn_relu_kernel(p_ref, w_ref, b_ref, o_ref):
    # p_ref: (TM, 294)  bf16 im2col patches, pair-packed (2 output positions per row)
    # w_ref: (294, 128) bf16 block-diag(w2d, w2d) with the BN scale folded in
    # b_ref: (1, 128)   f32 folded BN bias, repeated for both packed positions
    # o_ref: (TM, 128)  bf16 lane-dense output (2 output positions x 64 channels per row)
    acc = jnp.dot(p_ref[...], w_ref[...], preferred_element_type=jnp.float32)
    o_ref[...] = jnp.maximum(acc + b_ref[...], 0.0).astype(o_ref.dtype)


def _maxpool_kernel(y_ref, o_ref):
    # y_ref: (PH, 2, Wh, 128) one image's relu(conv1) output: dim 1 = conv-row parity,
    #        last dim = 2 consecutive conv columns x 64 channels (pair-packed lanes).
    # o_ref: (PH, Wh, 64)     3x3 / stride-2 / pad-1 max-pooled output.
    # Border taps are index-clamped instead of zero-padded: every value is >= 0 (ReLU),
    # and the clamped tap duplicates a tap already inside the window, so the max is identical.
    e = y_ref[:, 0]                                            # conv rows 2*py
    o = y_ref[:, 1]                                            # conv rows 2*py + 1
    o_up = jnp.concatenate([o[:1], o[:-1]], axis=0)            # conv rows 2*py - 1 (top clamped)
    # pairwise max tree (keeps live ranges short; v5e does bf16 max via f32 internally)
    r = jnp.maximum(jnp.maximum(e, o), o_up)                   # (PH, Wh, 128)
    a = r[:, :, :C_OUT]                                        # conv cols 2*px
    b = r[:, :, C_OUT:]                                        # conv cols 2*px + 1
    b_left = jnp.concatenate([b[:, :1], b[:, :-1]], axis=1)    # conv cols 2*px - 1 (left clamped)
    o_ref[...] = jnp.maximum(jnp.maximum(a, b), b_left)


# ---------------- wrapper ----------------

def visible_module_forward(x_nchw, params):
    w = params["conv1_w"]          # (7, 7, 3, 64) == PyTorch (64,3,7,7).transpose(2,3,1,0)
    gamma, beta = params["bn1_gamma"], params["bn1_beta"]
    mean, var = params["bn1_mean"], params["bn1_var"]

    # ---- layout glue in bf16 (halves wrapper HBM traffic; MXU consumes bf16 anyway) ----
    x = jnp.transpose(x_nchw.astype(jnp.bfloat16), (0, 2, 3, 1))          # NHWC
    N, H, W_, _ = x.shape
    OH = (H + 2 * CONV_PAD - CONV_K) // CONV_STRIDE + 1
    OW = (W_ + 2 * CONV_PAD - CONV_K) // CONV_STRIDE + 1

    xpad = jnp.pad(x, ((0, 0), (CONV_PAD, CONV_PAD), (CONV_PAD, CONV_PAD), (0, 0)))
    cols = []
    for ky in range(CONV_K):
        for kx in range(CONV_K):
            cols.append(xpad[:, ky:ky + CONV_STRIDE * (OH - 1) + 1:CONV_STRIDE,
                                kx:kx + CONV_STRIDE * (OW - 1) + 1:CONV_STRIDE, :])
    patches = jnp.concatenate(cols, axis=-1)                  # (N, OH, OW, 147) bf16

    # pair-pack consecutive output columns so the conv kernel writes full 128-lane rows
    OWe = OW + (OW % 2)
    if OWe != OW:
        patches = jnp.pad(patches, ((0, 0), (0, 0), (0, 1), (0, 0)))
    Wh = OWe // 2
    patches2 = patches.reshape(N * OH * Wh, K_PAIR)           # (M2, 294)

    # ---- fold BN (inference) into weight + bias; block-diagonal weight for the pair packing ----
    scale = (gamma / jnp.sqrt(var + BN_EPS)).astype(jnp.float32)           # (64,)
    w2d = (w.reshape(K_TAPS, C_OUT).astype(jnp.float32) * scale[None, :]).astype(jnp.bfloat16)
    z = jnp.zeros_like(w2d)
    w_pair = jnp.concatenate([jnp.concatenate([w2d, z], axis=1),
                              jnp.concatenate([z, w2d], axis=1)], axis=0)  # (294, 128)
    bias = beta - mean * scale
    bias2 = jnp.concatenate([bias, bias]).reshape(1, 2 * C_OUT).astype(jnp.float32)

    # ---- conv1 + bn1 + relu ----
    M2 = N * OH * Wh
    steps = max(2, -(-M2 // MAX_TM_CONV))                     # >=2 grid steps -> both v7x TCs busy
    TM = min(_round_up(-(-M2 // steps), 8), _round_up(M2, 8))
    M2_pad = _round_up(M2, TM)
    if M2_pad != M2:
        patches2 = jnp.pad(patches2, ((0, M2_pad - M2), (0, 0)))

    conv_out = pl.pallas_call(
        _conv_bn_relu_kernel,
        out_shape=jax.ShapeDtypeStruct((M2_pad, 2 * C_OUT), jnp.bfloat16),
        grid_spec=pltpu.PrefetchScalarGridSpec(
            num_scalar_prefetch=0,
            grid=(M2_pad // TM,),
            in_specs=[
                pl.BlockSpec((TM, K_PAIR), lambda i: (i, 0)),
                pl.BlockSpec((K_PAIR, 2 * C_OUT), lambda i: (0, 0)),
                pl.BlockSpec((1, 2 * C_OUT), lambda i: (0, 0)),
            ],
            out_specs=pl.BlockSpec((TM, 2 * C_OUT), lambda i: (i, 0)),
        ),
        compiler_params=pltpu.CompilerParams(
            dimension_semantics=("parallel",),
            # allow XLA to fuse the im2col slice/concat producer into the pallas_call input
            # DMA instead of materializing the (M2, 294) patch tensor in HBM.
            allow_input_fusion=[True, False, False],
        ),
    )(patches2, w_pair, bias2)

    # ---- maxpool 3x3 / stride 2 / pad 1 (windowing fused into the kernel) ----
    # Rows M2..M2_pad of conv_out are relu(bias) garbage from the grid tail pad -> slice them off.
    y = conv_out[:M2].reshape(N, OH, Wh, 2 * C_OUT)
    if OWe != OW:
        # the padded output column also holds relu(bias) garbage; zero it (0 never wins the max)
        y = y.at[:, :, -1, C_OUT:].set(jnp.bfloat16(0))
    OHe = OH + (OH % 2)
    if OHe != OH:
        y = jnp.pad(y, ((0, 0), (0, 1), (0, 0), (0, 0)))      # zero row is safe post-ReLU
    PH = OHe // 2
    PW = Wh                                                   # == (OW - 1)//2 + 1
    yp = y.reshape(N * PH, 2, Wh, 2 * C_OUT)                  # free reshape: explicit row pairs

    pooled = pl.pallas_call(
        _maxpool_kernel,
        out_shape=jax.ShapeDtypeStruct((N * PH, PW, C_OUT), jnp.bfloat16),
        grid_spec=pltpu.PrefetchScalarGridSpec(
            num_scalar_prefetch=0,
            grid=(N,),                 # one image per step; N>=2 keeps both v7x TCs busy
            in_specs=[pl.BlockSpec((PH, 2, Wh, 2 * C_OUT), lambda n: (n, 0, 0, 0))],
            out_specs=pl.BlockSpec((PH, PW, C_OUT), lambda n: (n, 0, 0)),
        ),
        compiler_params=pltpu.CompilerParams(dimension_semantics=("parallel",)),
    )(yp)

    out = pooled.reshape(N, PH, PW, C_OUT).astype(jnp.float32)
    return jnp.transpose(out, (0, 3, 1, 2))                   # back to NCHW (PyTorch layout)


# ---------------- reference (pure JAX, for sanity check) ----------------

def _reference(x_nchw, params):
    x = jnp.transpose(x_nchw, (0, 2, 3, 1)).astype(jnp.float32)
    y = lax.conv_general_dilated(
        x, params["conv1_w"], window_strides=(CONV_STRIDE, CONV_STRIDE),
        padding=[(CONV_PAD, CONV_PAD), (CONV_PAD, CONV_PAD)],
        dimension_numbers=("NHWC", "HWIO", "NHWC"))
    scale = params["bn1_gamma"] / jnp.sqrt(params["bn1_var"] + BN_EPS)
    y = (y - params["bn1_mean"]) * scale + params["bn1_beta"]
    y = jnp.maximum(y, 0.0)
    y = lax.reduce_window(y, -jnp.inf, lax.max, (1, POOL_K, POOL_K, 1),
                          (1, POOL_STRIDE, POOL_STRIDE, 1),
                          [(0, 0), (POOL_PAD, POOL_PAD), (POOL_PAD, POOL_PAD), (0, 0)])
    return jnp.transpose(y, (0, 3, 1, 2))


def init_params(key):
    k_w, k_g, k_b, k_m, k_v = jax.random.split(key, 5)
    fan_in = CONV_K * CONV_K * C_IN
    return {
        # stored as (kh, kw, cin, cout); PyTorch conv1.weight is (cout, cin, kh, kw)
        "conv1_w": jax.random.normal(k_w, (CONV_K, CONV_K, C_IN, C_OUT), jnp.float32)
                   * (1.0 / jnp.sqrt(fan_in)),
        "bn1_gamma": jax.random.uniform(k_g, (C_OUT,), jnp.float32, 0.5, 1.5),
        "bn1_beta": 0.1 * jax.random.normal(k_b, (C_OUT,), jnp.float32),
        "bn1_mean": 0.1 * jax.random.normal(k_m, (C_OUT,), jnp.float32),
        "bn1_var": jax.random.uniform(k_v, (C_OUT,), jnp.float32, 0.5, 1.5),
    }


if __name__ == "__main__":
    key = jax.random.PRNGKey(0)
    k_x, k_p = jax.random.split(key)
    # NCHW input, 3 channels as required by resnet conv1
    x = jax.random.normal(k_x, (2, 3, 16, 16), jnp.float32)
    params = init_params(k_p)

    out = jax.block_until_ready(jax.jit(visible_module_forward)(x, params))
    ref = jax.block_until_ready(_reference(x, params))

    assert out.shape == ref.shape == (2, 64, 4, 4), (out.shape, ref.shape)
    # tolerance accounts for bf16 operands/outputs and bf16 MXU accumulation into f32
    assert jnp.allclose(out, ref, atol=5e-2, rtol=5e-2), float(jnp.max(jnp.abs(out - ref)))

    print("KERNEL_OK")
</pallas_src>

<mosaic_0001>
module attributes {stable_mosaic.version = 11 : i64} {
  func.func @_conv_bn_relu_kernel(%arg0: i32, %arg1: memref<32x294xbf16, #tpu.memory_space<vmem>>, %arg2: memref<294x128xbf16, #tpu.memory_space<vmem>>, %arg3: memref<1x128xf32, #tpu.memory_space<vmem>>, %arg4: memref<32x128xbf16, #tpu.memory_space<vmem>>) attributes {dimension_semantics = [#tpu.dimension_semantics<parallel>], iteration_bounds = array<i64: 2>, scalar_prefetch = 0 : i64, scratch_operands = 0 : i64, tpu.core_type = #tpu.core_type<tc>, window_params = [{transform_indices = @transform_0, window_bounds = array<i64: 32, 294>}, {pipeline_mode = #tpu.pipeline_mode<synchronous>, transform_indices = @transform_1, window_bounds = array<i64: 294, 128>}, {pipeline_mode = #tpu.pipeline_mode<synchronous>, transform_indices = @transform_2, window_bounds = array<i64: 1, 128>}, {transform_indices = @transform_3, window_bounds = array<i64: 32, 128>}]} {
    %c0 = arith.constant 0 : index
    %c0_0 = arith.constant 0 : index
    %0 = vector.load %arg1[%c0, %c0_0] : memref<32x294xbf16, #tpu.memory_space<vmem>>, vector<32x294xbf16>
    %c0_1 = arith.constant 0 : index
    %c0_2 = arith.constant 0 : index
    %1 = vector.load %arg2[%c0_1, %c0_2] : memref<294x128xbf16, #tpu.memory_space<vmem>>, vector<294x128xbf16>
    %cst = arith.constant dense<0.000000e+00> : vector<32x128xf32>
    %2 = tpu.matmul %0, %1, %cst {dimension_numbers = #tpu.dot_dimension_numbers<[1], [0], [0], [1], [0, 0, 1, 1], [], []>} : vector<32x294xbf16>, vector<294x128xbf16>, vector<32x128xf32> -> vector<32x128xf32>
    %c0_3 = arith.constant 0 : index
    %c0_4 = arith.constant 0 : index
    %3 = vector.load %arg3[%c0_3, %c0_4] : memref<1x128xf32, #tpu.memory_space<vmem>>, vector<1x128xf32>
    %4 = vector.broadcast %3 : vector<1x128xf32> to vector<32x128xf32>
    %5 = arith.addf %2, %4 : vector<32x128xf32>
    %cst_5 = arith.constant 0.000000e+00 : f32
    %6 = vector.broadcast %cst_5 : f32 to vector<32x128xf32>
    %7 = arith.maximumf %5, %6 : vector<32x128xf32>
    %8 = arith.truncf %7 : vector<32x128xf32> to vector<32x128xbf16>
    %c0_6 = arith.constant 0 : index
    %c0_7 = arith.constant 0 : index
    %9 = vector.load %arg4[%c0_6, %c0_7] : memref<32x128xbf16, #tpu.memory_space<vmem>>, vector<32x128xbf16>
    tpu.vector_store %arg4[%c0_6, %c0_7], %8 {strides = array<i32>} : memref<32x128xbf16, #tpu.memory_space<vmem>>, vector<32x128xbf16>,
    return
  }
  func.func @transform_0(%arg0: i32) -> (i32, i32) {
    %c0_i32 = arith.constant 0 : i32
    %c0_i32_0 = arith.constant 0 : i32
    return %arg0, %c0_i32 : i32, i32
  }
  func.func @transform_1(%arg0: i32) -> (i32, i32) {
    %c0_i32 = arith.constant 0 : i32
    %c0_i32_0 = arith.constant 0 : i32
    %c0_i32_1 = arith.constant 0 : i32
    return %c0_i32, %c0_i32_0 : i32, i32
  }
  func.func @transform_2(%arg0: i32) -> (i32, i32) {
    %c0_i32 = arith.constant 0 : i32
    %c0_i32_0 = arith.constant 0 : i32
    %c0_i32_1 = arith.constant 0 : i32
    return %c0_i32, %c0_i32_0 : i32, i32
  }
  func.func @transform_3(%arg0: i32) -> (i32, i32) {
    %c0_i32 = arith.constant 0 : i32
    %c0_i32_0 = arith.constant 0 : i32
    return %arg0, %c0_i32 : i32, i32
  }
}

module attributes {stable_mosaic.version = 11 : i64} {
  func.func @_maxpool_kernel(%arg0: i32, %arg1: memref<4x2x4x128xbf16, #tpu.memory_space<vmem>>, %arg2: memref<4x4x64xbf16, #tpu.memory_space<vmem>>) attributes {dimension_semantics = [#tpu.dimension_semantics<parallel>], iteration_bounds = array<i64: 2>, scalar_prefetch = 0 : i64, scratch_operands = 0 : i64, tpu.core_type = #tpu.core_type<tc>, window_params = [{transform_indices = @transform_0, window_bounds = array<i64: 4, 2, 4, 128>}, {transform_indices = @transform_1, window_bounds = array<i64: 4, 4, 64>}]} {
    %c0 = arith.constant 0 : index
    %c0_0 = arith.constant 0 : index
    %c0_1 = arith.constant 0 : index
    %c0_2 = arith.constant 0 : index
    %0 = vector.load %arg1[%c0, %c0_0, %c0_1, %c0_2] : memref<4x2x4x128xbf16, #tpu.memory_space<vmem>>, vector<4x1x4x128xbf16>
    %1 = vector.shape_cast %0 : vector<4x1x4x128xbf16> to vector<4x4x128xbf16>
    %c0_3 = arith.constant 0 : index
    %c1 = arith.constant 1 : index
    %c0_4 = arith.constant 0 : index
    %c0_5 = arith.constant 0 : index
    %2 = vector.load %arg1[%c0_3, %c1, %c0_4, %c0_5] : memref<4x2x4x128xbf16, #tpu.memory_space<vmem>>, vector<4x1x4x128xbf16>
    %3 = vector.shape_cast %2 : vector<4x1x4x128xbf16> to vector<4x4x128xbf16>
    %4 = vector.extract_strided_slice %3 {offsets = [0, 0, 0], sizes = [1, 4, 128], strides = [1, 1, 1]} : vector<4x4x128xbf16> to vector<1x4x128xbf16>
    %5 = vector.extract_strided_slice %3 {offsets = [0, 0, 0], sizes = [3, 4, 128], strides = [1, 1, 1]} : vector<4x4x128xbf16> to vector<3x4x128xbf16>
    %6 = tpu.concatenate %4, %5 in 0 : vector<1x4x128xbf16>, vector<3x4x128xbf16> -> vector<4x4x128xbf16>
    %7 = arith.maximumf %1, %3 : vector<4x4x128xbf16>
    %8 = arith.maximumf %7, %6 : vector<4x4x128xbf16>
    %9 = vector.extract_strided_slice %8 {offsets = [0, 0, 0], sizes = [4, 4, 64], strides = [1, 1, 1]} : vector<4x4x128xbf16> to vector<4x4x64xbf16>
    %10 = vector.extract_strided_slice %8 {offsets = [0, 0, 64], sizes = [4, 4, 64], strides = [1, 1, 1]} : vector<4x4x128xbf16> to vector<4x4x64xbf16>
    %11 = vector.extract_strided_slice %10 {offsets = [0, 0, 0], sizes = [4, 1, 64], strides = [1, 1, 1]} : vector<4x4x64xbf16> to vector<4x1x64xbf16>
    %12 = vector.extract_strided_slice %10 {offsets = [0, 0, 0], sizes = [4, 3, 64], strides = [1, 1, 1]} : vector<4x4x64xbf16> to vector<4x3x64xbf16>
    %13 = tpu.concatenate %11, %12 in 1 : vector<4x1x64xbf16>, vector<4x3x64xbf16> -> vector<4x4x64xbf16>
    %14 = arith.maximumf %9, %10 : vector<4x4x64xbf16>
    %15 = arith.maximumf %14, %13 : vector<4x4x64xbf16>
    %c0_6 = arith.constant 0 : index
    %c0_7 = arith.constant 0 : index
    %c0_8 = arith.constant 0 : index
    %16 = vector.load %arg2[%c0_6, %c0_7, %c0_8] : memref<4x4x64xbf16, #tpu.memory_space<vmem>>, vector<4x4x64xbf16>
    tpu.vector_store %arg2[%c0_6, %c0_7, %c0_8], %15 {strides = array<i32>} : memref<4x4x64xbf16, #tpu.memory_space<vmem>>, vector<4x4x64xbf16>,
    return
  }
  func.func @transform_0(%arg0: i32) -> (i32, i32, i32, i32) {
    %c0_i32 = arith.constant 0 : i32
    %c0_i32_0 = arith.constant 0 : i32
    %c0_i32_1 = arith.constant 0 : i32
    %c0_i32_2 = arith.constant 0 : i32
    return %arg0, %c0_i32, %c0_i32_0, %c0_i32_1 : i32, i32, i32, i32
  }
  func.func @transform_1(%arg0: i32) -> (i32, i32, i32) {
    %c0_i32 = arith.constant 0 : i32
    %c0_i32_0 = arith.constant 0 : i32
    %c0_i32_1 = arith.constant 0 : i32
    return %arg0, %c0_i32, %c0_i32_0 : i32, i32, i32
  }
}

</mosaic_0001>

<llo_original>
// kernel: visible_module_forward.3
$region0: #{visible_module_forward.3}
  #allocation0 [shape = 'u32[]', space=smem, size = 0x4, offset = 0x4, fixed_abs, tag = 'smem constant byte address 0x4 - core index']
  #allocation1 [shape = 'u32[72,128]{1,0:T(1,128)}', space=vmem, size = 0x9000, scoped, tag = 'internal scratch']
  %s0 = inlined_call_operand.vmem [shape: bf16[8,2,4,128], index: 0, kind: input, shape index: {}]
  %s1 = inlined_call_operand.vmem [shape: bf16[8,4,64], index: 1, kind: output, shape index: {}]
  %s2 = sld [smem:[#allocation0]]
  $region37: #{visible_module_forward.3} parent=0
    _
  %s4 = ssub.s32 1, %s2
  %s5 = scalar_select 0, %s4, %s2
  loop: start=0, step=1, limit=4
  $region2: #{visible_module_forward.3} parent=0 // loop_pre_header
    _
  $region3: #{visible_module_forward.3} parent=0 // loop_header
    %s7 = sphi 0, %s11
    %p8 = scmp.ge.s32.totalorder %s7, 4
    %s17 = sphi 0, %s19
    %s20 = sphi 0, %s17
    %s21 = sphi 0, %s20
    %s37 = sphi 0, %s21
    %s43 = sphi 0, %s45
    %s46 = sphi 0, %s43
    %s47 = sphi 0, %s46
    %s63 = sphi 0, %s47
  $region4: #{visible_module_forward.3} parent=0 // loop_header_branch
    %10 = sbr.rel (%p8) target = $region8
  $region5: #{visible_module_forward.3} parent=0 // loop_body
    %s12 = ssub.s32 %s7, 1
    %s13 = ssub.s32 %s7, 2
    %s14 = sadd.s32 %s7, 1
    %s15 = ssub.s32 %s7, %s14
    %p16 = scmp.eq.s32.totalorder %s15, 0
    %s18 = sadd.s32 %s17, 1
    %s19 = scalar_select %p16, %s17, %s18
    %p22 = pneg %p16
    %p23 = scmp.eq.s32.totalorder %s7, 1
    %p24 = por %p22, %p23
    %p25 = scmp.ne.s32.totalorder %s17, %s20
    %p26 = scmp.eq.s32.totalorder %s7, 0
    %p27 = por %p25, %p26
    %p28 = scmp.ne.s32.totalorder %s17, %s20
    %p29 = scmp.eq.s32.totalorder %s12, 1
    %p30 = por %p28, %p29
    %p31 = scmp.ne.s32.totalorder %s20, %s21
    %p32 = scmp.eq.s32.totalorder %s12, 0
    %p33 = por %p31, %p32
    %p34 = scmp.ne.s32.totalorder %s20, %s21
    %p35 = scmp.eq.s32.totalorder %s13, 1
    %p36 = por %p34, %p35
    %p38 = scmp.ne.s32.totalorder %s21, %s37
    %p39 = scmp.eq.s32.totalorder %s13, 0
    %p40 = por %p38, %p39
    %s41 = ssub.s32 %s7, %s14
    %p42 = scmp.eq.s32.totalorder %s41, 0
    %s44 = sadd.s32 %s43, 1
    %s45 = scalar_select %p42, %s43, %s44
    %p48 = pneg %p42
    %p49 = scmp.eq.s32.totalorder %s7, 1
    %p50 = por %p48, %p49
    %p51 = scmp.ne.s32.totalorder %s43, %s46
    %p52 = scmp.eq.s32.totalorder %s7, 0
    %p53 = por %p51, %p52
    %p54 = scmp.ne.s32.totalorder %s43, %s46
    %p55 = scmp.eq.s32.totalorder %s12, 1
    %p56 = por %p54, %p55
    %p57 = scmp.ne.s32.totalorder %s46, %s47
    %p58 = scmp.eq.s32.totalorder %s12, 0
    %p59 = por %p57, %p58
    %p60 = scmp.ne.s32.totalorder %s46, %s47
    %p61 = scmp.eq.s32.totalorder %s13, 1
    %p62 = por %p60, %p61
    %p64 = scmp.ne.s32.totalorder %s47, %s63
    %p65 = scmp.eq.s32.totalorder %s13, 0
    %p66 = por %p64, %p65
    %p67 = scmp.le.s32.totalorder 1, %s7
    %p68 = scmp.lt.s32.totalorder %s7, 3
    %p69 = pnand %p67, %p68
    %p70 = pneg %p69
    // Predicated region
    $region9: #{visible_module_forward.3} parent=5 // pred_check
      _
    $region10: #{visible_module_forward.3} parent=5 // pred_check_branch
      %72 = sbr.rel (%p69) target = $region12
    $region11: #{visible_module_forward.3} parent=5 // pred_region
      %s73 = ssub.s32 %s7, 1
    $region12: #{visible_module_forward.3} parent=5 // pred_fallthru
      _
    %p74 = scmp.lt.s32.totalorder %s7, 2
    // Predicated region
    $region13: #{visible_module_forward.3} parent=5 // pred_check
      %p75 = pneg %p74
    $region14: #{visible_module_forward.3} parent=5 // pred_check_branch
      %77 = sbr.rel (%p75) target = $region16
    $region15: #{visible_module_forward.3} parent=5 // pred_region
      // Predicated region
      $region17: #{visible_module_forward.3} parent=15 // pred_check
        %p78 = pneg %p27
      $region18: #{visible_module_forward.3} parent=15 // pred_check_branch
        %80 = sbr.rel (%p78) target = $region20
      $region19: #{visible_module_forward.3} parent=15 // pred_region
        %s81 = smul.u32 4, %s7
        %p82 = scmp.lt.s32.totalorder %s81, 7
        %s83 = scalar_select %p82, %s81, 7
        %s84 = smul.addr %s83, 2
        %s85 = smul.addr %s84, 2
        %s86 = scalar_lea.vmem %s0, %s85
        %s87 = smul.u32 4, %s7
      $region20: #{visible_module_forward.3} parent=15 // pred_fallthru
        _
    $region16: #{visible_module_forward.3} parent=5 // pred_fallthru
      _
    %p88 = scmp.le.s32.totalorder 1, %s7
    %p89 = scmp.lt.s32.totalorder %s7, 3
    %p90 = pnand %p88, %p89
    %p91 = pneg %p90
    // Predicated region
    $region21: #{visible_module_forward.3} parent=5 // pred_check
      _
    $region22: #{visible_module_forward.3} parent=5 // pred_check_branch
      %93 = sbr.rel (%p90) target = $region24
    $region23: #{visible_module_forward.3} parent=5 // pred_region
      %s94 = ssub.s32 %s7, 1
      %s95 = smul.u32 4, %s12
      %p96 = scmp.lt.s32.totalorder %s95, 7
      %s97 = scalar_select %p96, %s95, 7
      %s98 = smul.addr %s97, 2
      %s99 = smul.addr %s98, 2
      %s100 = scalar_lea.vmem %s0, %s99
      %p101 = pneg %p33
      %p102 = pneg %p30
      %p103 = pneg %p59
      %p104 = pneg %p56
      %s105 = smul.u32 4, %s12
      %p106 = scmp.lt.s32.totalorder %s105, 7
      %s107 = scalar_select %p106, %s105, 7
      %s108 = smul.addr %s107, 2
      %s109 = scalar_lea.vmem %s1, %s108
      %s110 = smul.u32 4, %s12
      %p111 = scmp.lt.s32.totalorder %s110, 7
      %s112 = scalar_select %p111, %s110, 7
      %s113 = smul.addr %s112, 2
      %s114 = smul.addr %s113, 2
      %s115 = scalar_lea.vmem %s0, %s114
      %s116 = smul.u32 4, %s12
      %s117 = smul.u32 4, %s12
      %p118 = scmp.lt.s32.totalorder %s117, 7
      %s119 = scalar_select %p118, %s117, 7
      %s120 = smul.addr %s119, 2
      %s121 = scalar_lea.vmem %s1, %s120
      %s122 = smul.u32 4, %s12
      %v123 = vld [vmem:[%s115] sm:$0x3]
      %v124 = vld [vmem:[%s115 + $0x4] sm:$0x3]
      %v125 = vld [vmem:[%s115 + $0x8] sm:$0x3]
      %v126 = vld [vmem:[%s115 + $0xc] sm:$0x3]
      %s127 = scalar_lea.vmem %s115, 2
      %v128 = vld [vmem:[%s127] sm:$0x3]
      %v129 = vld [vmem:[%s127 + $0x4] sm:$0x3]
      %v130 = vld [vmem:[%s127 + $0x8] sm:$0x3]
      %v131 = vld [vmem:[%s127 + $0xc] sm:$0x3]
      %v132 = vunpack.c.l.bf16 %v123
      %v133 = vunpack.c.l.bf16 %v124
      %v134 = vunpack.c.l.bf16 %v125
      %v135 = vunpack.c.l.bf16 %v126
      %v136 = vunpack.c.l.bf16 %v128
      %v137 = vunpack.c.l.bf16 %v129
      %v138 = vunpack.c.l.bf16 %v130
      %v139 = vunpack.c.l.bf16 %v131
      %v140 = vmax.f32 %v132, %v136
      %v141 = vmax.f32 %v133, %v137
      %v142 = vmax.f32 %v134, %v138
      %v143 = vmax.f32 %v135, %v139
      %v144 = vpack.c.bf16 %v140, %v140
      %v145 = vpack.c.bf16 %v141, %v141
      %v146 = vpack.c.bf16 %v142, %v142
      %v147 = vpack.c.bf16 %v143, %v143
      %v148 = vunpack.c.l.bf16 %v144
      %v149 = vunpack.c.l.bf16 %v145
      %v150 = vunpack.c.l.bf16 %v146
      %v151 = vunpack.c.l.bf16 %v147
      %v152 = vmax.f32 %v148, %v136
      %v153 = vmax.f32 %v149, %v136
      %v154 = vmax.f32 %v150, %v137
      %v155 = vmax.f32 %v151, %v138
      %v156 = vpack.c.bf16 %v152, %v152
      %v157 = vpack.c.bf16 %v153, %v153
      %v158 = vpack.c.bf16 %v154, %v154
      %v159 = vpack.c.bf16 %v155, %v155
      %v164 = vunpack.c.l.b16 %v156
      %v165 = vunpack.c.l.b16 %v157
      %v166 = vunpack.c.l.b16 %v158
      %v167 = vunpack.c.l.b16 %v159
      %v168 = vpack.c.b16 %v164, %v164
      %v169 = vpack.c.b16 %v165, %v165
      %v170 = vpack.c.b16 %v166, %v166
      %v171 = vpack.c.b16 %v167, %v167
      %v173 = vshrl.u32 %v168, 16
      %v175 = vrot.slane %v173, 7
      %v176 = vshll.u32 %v168, 16
      %v178 = vor.u32 %v175, %v176
      %v180 = vshrl.u32 %v169, 16
      %v182 = vrot.slane %v180, 7
      %v183 = vshll.u32 %v169, 16
      %v185 = vor.u32 %v182, %v183
      %v187 = vshrl.u32 %v170, 16
      %v189 = vrot.slane %v187, 7
      %v190 = vshll.u32 %v170, 16
      %v192 = vor.u32 %v189, %v190
      %v194 = vshrl.u32 %v171, 16
      %v196 = vrot.slane %v194, 7
      %v197 = vshll.u32 %v171, 16
      %v199 = vor.u32 %v196, %v197
      %vm204 = vcmask 1040384
      %vm205 = vsmask.f32 256
      %vm206 = vmand %vm204, %vm205
      %v207 = vsel %vm206, %v156, %v178
      %v208 = vsel %vm206, %v157, %v185
      %v209 = vsel %vm206, %v158, %v192
      %v210 = vsel %vm206, %v159, %v199
      %v211 = vunpack.c.l.bf16 %v156
      %v212 = vunpack.c.l.bf16 %v157
      %v213 = vunpack.c.l.bf16 %v158
      %v214 = vunpack.c.l.bf16 %v159
      %219 = vrot.lane.b32.xlu0 %v211, 64
      %v220 = vpop.permute.xlu0 %219
      %221 = vrot.lane.b32.xlu0 %v212, 64
      %v222 = vpop.permute.xlu0 %221
      %223 = vrot.lane.b32.xlu0 %v213, 64
      %v224 = vpop.permute.xlu0 %223
      %225 = vrot.lane.b32.xlu0 %v214, 64
      %v226 = vpop.permute.xlu0 %225
      %v231 = vmax.f32 %v211, %v220
      %v232 = vmax.f32 %v212, %v222
      %v233 = vmax.f32 %v213, %v224
      %v234 = vmax.f32 %v214, %v226
      %v235 = vpack.c.bf16 %v231, %v231
      %v236 = vpack.c.bf16 %v232, %v232
      %v237 = vpack.c.bf16 %v233, %v233
      %v238 = vpack.c.bf16 %v234, %v234
      %v239 = vunpack.c.l.bf16 %v235
      %v240 = vunpack.c.l.bf16 %v236
      %v241 = vunpack.c.l.bf16 %v237
      %v242 = vunpack.c.l.bf16 %v238
      %v243 = vunpack.c.l.bf16 %v207
      %v244 = vunpack.c.l.bf16 %v208
      %v245 = vunpack.c.l.bf16 %v209
      %v246 = vunpack.c.l.bf16 %v210
      %251 = vrot.lane.b32.xlu0 %v243, 64
      %v252 = vpop.permute.xlu0 %251
      %253 = vrot.lane.b32.xlu0 %v244, 64
      %v254 = vpop.permute.xlu0 %253
      %255 = vrot.lane.b32.xlu0 %v245, 64
      %v256 = vpop.permute.xlu0 %255
      %257 = vrot.lane.b32.xlu0 %v246, 64
      %v258 = vpop.permute.xlu0 %257
      %v263 = vmax.f32 %v239, %v252
      %v264 = vmax.f32 %v240, %v254
      %v265 = vmax.f32 %v241, %v256
      %v266 = vmax.f32 %v242, %v258
      %v267 = vpack.c.bf16 %v263, %v263
      %v268 = vpack.c.bf16 %v264, %v264
      %v269 = vpack.c.bf16 %v265, %v265
      %v270 = vpack.c.bf16 %v266, %v266
      %vm271 = vcmask 517120
      %272 = vst.msk [vmem:[%s121] sm:$0x3] %vm271, %v267
      %273 = vst.msk [vmem:[%s121 + $0x2] sm:$0x3] %vm271, %v268
      %274 = vst.msk [vmem:[%s121 + $0x4] sm:$0x3] %vm271, %v269
      %275 = vst.msk [vmem:[%s121 + $0x6] sm:$0x3] %vm271, %v270
      %s276 = smul.u32 4, %s12
      %p277 = scmp.lt.s32.totalorder %s276, 7
      %s278 = scalar_select %p277, %s276, 7
      %s279 = smul.addr %s278, 2
      %s280 = scalar_lea.vmem %s1, %s279
      // Predicated region
      $region25: #{visible_module_forward.3} parent=23 // pred_check
        %p281 = pneg %p56
      $region26: #{visible_module_forward.3} parent=23 // pred_check_branch
        %283 = sbr.rel (%p281) target = $region28
      $region27: #{visible_module_forward.3} parent=23 // pred_region
        %s284 = smul.u32 4, %s12
      $region28: #{visible_module_forward.3} parent=23 // pred_fallthru
        _
    $region24: #{visible_module_forward.3} parent=5 // pred_fallthru
      _
    %p285 = scmp.le.s32.totalorder 2, %s7
    // Predicated region
    $region29: #{visible_module_forward.3} parent=5 // pred_check
      %p286 = pneg %p285
    $region30: #{visible_module_forward.3} parent=5 // pred_check_branch
      %288 = sbr.rel (%p286) target = $region32
    $region31: #{visible_module_forward.3} parent=5 // pred_region
      %s289 = ssub.s32 %s7, 2
      // Predicated region
      $region33: #{visible_module_forward.3} parent=31 // pred_check
        %p290 = pneg %p62
      $region34: #{visible_module_forward.3} parent=31 // pred_check_branch
        %292 = sbr.rel (%p290) target = $region36
      $region35: #{visible_module_forward.3} parent=31 // pred_region
        %s293 = smul.u32 4, %s13
        %p294 = scmp.lt.s32.totalorder %s293, 7
        %s295 = scalar_select %p294, %s293, 7
        %s296 = smul.addr %s295, 2
        %s297 = scalar_lea.vmem %s1, %s296
      $region36: #{visible_module_forward.3} parent=31 // pred_fallthru
        _
    $region32: #{visible_module_forward.3} parent=5 // pred_fallthru
      _
  $region6: #{visible_module_forward.3} parent=0 // loop_footer
    %s11 = sadd.s32 1, %s7
  $region7: #{visible_module_forward.3} parent=0 // loop_footer_branch
    %6 = sbr.rel target = $region3
  $region8: #{visible_module_forward.3} parent=0 // loop_exit
    _

// kernel: visible_module_forward.2
$region0: #{visible_module_forward.2}
  #allocation0 [shape = 'u32[]', space=smem, size = 0x4, offset = 0x4, fixed_abs, tag = 'smem constant byte address 0x4 - core index']
  #allocation1 [shape = 'u32[72,128]{1,0:T(1,128)}', space=vmem, size = 0x9000, scoped, tag = 'internal scratch']
  %s0 = inlined_call_operand.vmem [shape: bf16[64,294], index: 0, kind: input, shape index: {}]
  %s1 = inlined_call_operand.vmem [shape: bf16[294,128], index: 1, kind: input, shape index: {}]
  %s2 = inlined_call_operand.vmem [shape: f32[1,128], index: 2, kind: input, shape index: {}]
  %s3 = inlined_call_operand.vmem [shape: bf16[64,128], index: 3, kind: output, shape index: {}]
  %s4 = sld [smem:[#allocation0]]
  $region45: #{visible_module_forward.2} parent=0
    _
  %s6 = ssub.s32 1, %s4
  %s7 = scalar_select 0, %s6, %s4
  loop: start=0, step=1, limit=4
  $region2: #{visible_module_forward.2} parent=0 // loop_pre_header
    _
  $region3: #{visible_module_forward.2} parent=0 // loop_header
    %s9 = sphi 0, %s13
    %p10 = scmp.ge.s32.totalorder %s9, 4
    %s19 = sphi 0, %s21
    %s22 = sphi 0, %s19
    %s23 = sphi 0, %s22
    %s39 = sphi 0, %s23
    %s43 = sphi 0, %s43
    %s45 = sphi 0, %s43
    %s46 = sphi 0, %s45
    %s60 = sphi 0, %s46
    %s64 = sphi 0, %s64
    %s66 = sphi 0, %s64
    %s67 = sphi 0, %s66
    %s81 = sphi 0, %s67
    %s87 = sphi 0, %s89
    %s90 = sphi 0, %s87
    %s91 = sphi 0, %s90
    %s107 = sphi 0, %s91
  $region4: #{visible_module_forward.2} parent=0 // loop_header_branch
    %12 = sbr.rel (%p10) target = $region8
  $region5: #{visible_module_forward.2} parent=0 // loop_body
    %s14 = ssub.s32 %s9, 1
    %s15 = ssub.s32 %s9, 2
    %s16 = sadd.s32 %s9, 1
    %s17 = ssub.s32 %s9, %s16
    %p18 = scmp.eq.s32.totalorder %s17, 0
    %s20 = sadd.s32 %s19, 1
    %s21 = scalar_select %p18, %s19, %s20
    %p24 = pneg %p18
    %p25 = scmp.eq.s32.totalorder %s9, 1
    %p26 = por %p24, %p25
    %p27 = scmp.ne.s32.totalorder %s19, %s22
    %p28 = scmp.eq.s32.totalorder %s9, 0
    %p29 = por %p27, %p28
    %p30 = scmp.ne.s32.totalorder %s19, %s22
    %p31 = scmp.eq.s32.totalorder %s14, 1
    %p32 = por %p30, %p31
    %p33 = scmp.ne.s32.totalorder %s22, %s23
    %p34 = scmp.eq.s32.totalorder %s14, 0
    %p35 = por %p33, %p34
    %p36 = scmp.ne.s32.totalorder %s22, %s23
    %p37 = scmp.eq.s32.totalorder %s15, 1
    %p38 = por %p36, %p37
    %p40 = scmp.ne.s32.totalorder %s23, %s39
    %p41 = scmp.eq.s32.totalorder %s15, 0
    %p42 = por %p40, %p41
    %s44 = sadd.s32 %s43, 1
    %p47 = scmp.eq.s32.totalorder %s9, 1
    %p48 = scmp.ne.s32.totalorder %s43, %s45
    %p49 = scmp.eq.s32.totalorder %s9, 0
    %p50 = por %p48, %p49
    %p51 = scmp.ne.s32.totalorder %s43, %s45
    %p52 = scmp.eq.s32.totalorder %s14, 1
    %p53 = por %p51, %p52
    %p54 = scmp.ne.s32.totalorder %s45, %s46
    %p55 = scmp.eq.s32.totalorder %s14, 0
    %p56 = por %p54, %p55
    %p57 = scmp.ne.s32.totalorder %s45, %s46
    %p58 = scmp.eq.s32.totalorder %s15, 1
    %p59 = por %p57, %p58
    %p61 = scmp.ne.s32.totalorder %s46, %s60
    %p62 = scmp.eq.s32.totalorder %s15, 0
    %p63 = por %p61, %p62
    %s65 = sadd.s32 %s64, 1
    %p68 = scmp.eq.s32.totalorder %s9, 1
    %p69 = scmp.ne.s32.totalorder %s64, %s66
    %p70 = scmp.eq.s32.totalorder %s9, 0
    %p71 = por %p69, %p70
    %p72 = scmp.ne.s32.totalorder %s64, %s66
    %p73 = scmp.eq.s32.totalorder %s14, 1
    %p74 = por %p72, %p73
    %p75 = scmp.ne.s32.totalorder %s66, %s67
    %p76 = scmp.eq.s32.totalorder %s14, 0
    %p77 = por %p75, %p76
    %p78 = scmp.ne.s32.totalorder %s66, %s67
    %p79 = scmp.eq.s32.totalorder %s15, 1
    %p80 = por %p78, %p79
    %p82 = scmp.ne.s32.totalorder %s67, %s81
    %p83 = scmp.eq.s32.totalorder %s15, 0
    %p84 = por %p82, %p83
    %s85 = ssub.s32 %s9, %s16
    %p86 = scmp.eq.s32.totalorder %s85, 0
    %s88 = sadd.s32 %s87, 1
    %s89 = scalar_select %p86, %s87, %s88
    %p92 = pneg %p86
    %p93 = scmp.eq.s32.totalorder %s9, 1
    %p94 = por %p92, %p93
    %p95 = scmp.ne.s32.totalorder %s87, %s90
    %p96 = scmp.eq.s32.totalorder %s9, 0
    %p97 = por %p95, %p96
    %p98 = scmp.ne.s32.totalorder %s87, %s90
    %p99 = scmp.eq.s32.totalorder %s14, 1
    %p100 = por %p98, %p99
    %p101 = scmp.ne.s32.totalorder %s90, %s91
    %p102 = scmp.eq.s32.totalorder %s14, 0
    %p103 = por %p101, %p102
    %p104 = scmp.ne.s32.totalorder %s90, %s91
    %p105 = scmp.eq.s32.totalorder %s15, 1
    %p106 = por %p104, %p105
    %p108 = scmp.ne.s32.totalorder %s91, %s107
    %p109 = scmp.eq.s32.totalorder %s15, 0
    %p110 = por %p108, %p109
    %p111 = scmp.le.s32.totalorder 1, %s9
    %p112 = scmp.lt.s32.totalorder %s9, 3
    %p113 = pnand %p111, %p112
    %p114 = pneg %p113
    // Predicated region
    $region9: #{visible_module_forward.2} parent=5 // pred_check
      _
    $region10: #{visible_module_forward.2} parent=5 // pred_check_branch
      %116 = sbr.rel (%p113) target = $region12
    $region11: #{visible_module_forward.2} parent=5 // pred_region
      %s117 = ssub.s32 %s9, 1
      // Predicated region
      $region13: #{visible_module_forward.2} parent=11 // pred_check
        %p118 = pneg %p56
      $region14: #{visible_module_forward.2} parent=11 // pred_check_branch
        %120 = sbr.rel (%p118) target = $region16
      $region15: #{visible_module_forward.2} parent=11 // pred_region
        _
      $region16: #{visible_module_forward.2} parent=11 // pred_fallthru
        _
      // Predicated region
      $region17: #{visible_module_forward.2} parent=11 // pred_check
        %p121 = pneg %p77
      $region18: #{visible_module_forward.2} parent=11 // pred_check_branch
        %123 = sbr.rel (%p121) target = $region20
      $region19: #{visible_module_forward.2} parent=11 // pred_region
        _
      $region20: #{visible_module_forward.2} parent=11 // pred_fallthru
        _
    $region12: #{visible_module_forward.2} parent=5 // pred_fallthru
      _
    %p124 = scmp.lt.s32.totalorder %s9, 2
    // Predicated region
    $region21: #{visible_module_forward.2} parent=5 // pred_check
      %p125 = pneg %p124
    $region22: #{visible_module_forward.2} parent=5 // pred_check_branch
      %127 = sbr.rel (%p125) target = $region24
    $region23: #{visible_module_forward.2} parent=5 // pred_region
      // Predicated region
      $region25: #{visible_module_forward.2} parent=23 // pred_check
        %p128 = pneg %p29
      $region26: #{visible_module_forward.2} parent=23 // pred_check_branch
        %130 = sbr.rel (%p128) target = $region28
      $region27: #{visible_module_forward.2} parent=23 // pred_region
        %s131 = smul.u32 4, %s9
        %p132 = scmp.lt.s32.totalorder %s131, 7
        %s133 = scalar_select %p132, %s131, 7
        %s134 = smul.addr %s133, 3
        %s135 = smul.addr %s134, 4
        %s136 = scalar_lea.vmem %s0, %s135
        %s137 = smul.u32 4, %s9
      $region28: #{visible_module_forward.2} parent=23 // pred_fallthru
        _
    $region24: #{visible_module_forward.2} parent=5 // pred_fallthru
      _
    %p138 = scmp.le.s32.totalorder 1, %s9
    %p139 = scmp.lt.s32.totalorder %s9, 3
    %p140 = pnand %p138, %p139
    %p141 = pneg %p140
    // Predicated region
    $region29: #{visible_module_forward.2} parent=5 // pred_check
      _
    $region30: #{visible_module_forward.2} parent=5 // pred_check_branch
      %143 = sbr.rel (%p140) target = $region32
    $region31: #{visible_module_forward.2} parent=5 // pred_region
      %s144 = ssub.s32 %s9, 1
      %s145 = smul.u32 4, %s14
      %p146 = scmp.lt.s32.totalorder %s145, 7
      %s147 = scalar_select %p146, %s145, 7
      %s148 = smul.addr %s147, 3
      %s149 = smul.addr %s148, 4
      %s150 = scalar_lea.vmem %s0, %s149
      %p151 = pneg %p35
      %p152 = pneg %p32
      %p153 = pneg %p56
      %p154 = pneg %p53
      %p155 = pneg %p77
      %p156 = pneg %p74
      %p157 = pneg %p103
      %p158 = pneg %p100
      %s159 = smul.u32 4, %s14
      %p160 = scmp.lt.s32.totalorder %s159, 7
      %s161 = scalar_select %p160, %s159, 7
      %s162 = smul.addr %s161, 4
      %s163 = scalar_lea.vmem %s3, %s162
      %s164 = smul.u32 4, %s14
      %p165 = scmp.lt.s32.totalorder %s164, 7
      %s166 = scalar_select %p165, %s164, 7
      %s167 = smul.addr %s166, 3
      %s168 = smul.addr %s167, 4
      %s169 = scalar_lea.vmem %s0, %s168
      %s170 = smul.u32 4, %s14
      %s171 = smul.u32 4, %s14
      %p172 = scmp.lt.s32.totalorder %s171, 7
      %s173 = scalar_select %p172, %s171, 7
      %s174 = smul.addr %s173, 4
      %s175 = scalar_lea.vmem %s3, %s174
      %s176 = smul.u32 4, %s14
      %v178 = vld [vmem:[%s169] sm:$0xff]
      %v179 = vld [vmem:[%s169 + $0x8] sm:$0xf]
      %v180 = vld [vmem:[%s169 + $0xc] sm:$0xff]
      %v181 = vld [vmem:[%s169 + $0x14] sm:$0xf]
      %v182 = vld [vmem:[%s169 + $0x18] sm:$0xff]
      %v183 = vld [vmem:[%s169 + $0x20] sm:$0xf]
      %v184 = vld [vmem:[%s169 + $0x24] sm:$0xff]
      %v185 = vld [vmem:[%s169 + $0x2c] sm:$0xf]
      %v186 = vld [vmem:[%s1] sm:$0xf]
      %v187 = vld [vmem:[%s1 + $0x4] sm:$0xf]
      %v188 = vld [vmem:[%s1 + $0x8] sm:$0xf]
      %v189 = vld [vmem:[%s1 + $0xc] sm:$0xf]
      %v190 = vld [vmem:[%s1 + $0x10] sm:$0xf]
      %v191 = vld [vmem:[%s1 + $0x14] sm:$0xf]
      %v192 = vld [vmem:[%s1 + $0x18] sm:$0xf]
      %v193 = vld [vmem:[%s1 + $0x1c] sm:$0xf]
      %v194 = vld [vmem:[%s1 + $0x20] sm:$0xf]
      %v195 = vld [vmem:[%s1 + $0x24] sm:$0xf]
      %v196 = vld [vmem:[%s1 + $0x28] sm:$0xf]
      %v197 = vld [vmem:[%s1 + $0x2c] sm:$0xf]
      %v198 = vld [vmem:[%s1 + $0x30] sm:$0xf]
      %v199 = vld [vmem:[%s1 + $0x34] sm:$0xf]
      %v200 = vld [vmem:[%s1 + $0x38] sm:$0xf]
      %v201 = vld [vmem:[%s1 + $0x3c] sm:$0xf]
      %v202 = vld [vmem:[%s1 + $0x40] sm:$0xf]
      %v203 = vld [vmem:[%s1 + $0x44] sm:$0xf]
      %v204 = vld [vmem:[%s1 + $0x48] sm:$0xf]
      %v205 = vld [vmem:[%s1 + $0x4c] sm:$0xf]
      %v206 = vld [vmem:[%s1 + $0x50] sm:$0xf]
      %v207 = vld [vmem:[%s1 + $0x54] sm:$0xf]
      %v208 = vld [vmem:[%s1 + $0x58] sm:$0xf]
      %v209 = vld [vmem:[%s1 + $0x5c] sm:$0xf]
      %v210 = vld [vmem:[%s1 + $0x60] sm:$0xf]
      %v211 = vld [vmem:[%s1 + $0x64] sm:$0xf]
      %v212 = vld [vmem:[%s1 + $0x68] sm:$0xf]
      %v213 = vld [vmem:[%s1 + $0x6c] sm:$0xf]
      %v214 = vld [vmem:[%s1 + $0x70] sm:$0xf]
      %v215 = vld [vmem:[%s1 + $0x74] sm:$0xf]
      %v216 = vld [vmem:[%s1 + $0x78] sm:$0xf]
      %v217 = vld [vmem:[%s1 + $0x7c] sm:$0xf]
      %v218 = vld [vmem:[%s1 + $0x80] sm:$0xf]
      %v219 = vld [vmem:[%s1 + $0x84] sm:$0xf]
      %v220 = vld [vmem:[%s1 + $0x88] sm:$0xf]
      %v221 = vld [vmem:[%s1 + $0x8c] sm:$0xf]
      %v222 = vld [vmem:[%s1 + $0x90] sm:$0x7]
      %v223 = vld [vmem:[%s2] sm:$0x1]
      %v225 = vperm.slane %v223, 0
      %v235 = vunpack.c.l.b16 %v178
      %v236 = vunpack.c.h.b16 %v178
      %v237 = vunpack.c.l.b16 %v179
      %v238 = vunpack.c.l.b16 %v180
      %v239 = vunpack.c.h.b16 %v180
      %v240 = vunpack.c.l.b16 %v181
      %v241 = vunpack.c.l.b16 %v182
      %v242 = vunpack.c.h.b16 %v182
      %v243 = vunpack.c.l.b16 %v183
      %v244 = vunpack.c.l.b16 %v184
      %v245 = vunpack.c.h.b16 %v184
      %v246 = vunpack.c.l.b16 %v185
      %v247 = vpack.c.b16 %v238, %v235
      %v248 = vpack.c.b16 %v239, %v236
      %v249 = vpack.c.b16 %v240, %v237
      %v250 = vpack.c.b16 %v244, %v241
      %v251 = vpack.c.b16 %v245, %v242
      %v252 = vpack.c.b16 %v246, %v243
      %v294 = vunpack.c.l.b16 %v186
      %v295 = vunpack.c.l.b16 %v187
      %v296 = vunpack.c.l.b16 %v188
      %v297 = vunpack.c.l.b16 %v189
      %v298 = vunpack.c.l.b16 %v190
      %v299 = vunpack.c.l.b16 %v191
      %v300 = vunpack.c.l.b16 %v192
      %v301 = vunpack.c.l.b16 %v193
      %v302 = vunpack.c.l.b16 %v194
      %v303 = vunpack.c.l.b16 %v195
      %v304 = vunpack.c.l.b16 %v196
      %v305 = vunpack.c.l.b16 %v197
      %v306 = vunpack.c.l.b16 %v198
      %v307 = vunpack.c.l.b16 %v199
      %v308 = vunpack.c.l.b16 %v200
      %v309 = vunpack.c.l.b16 %v201
      %v310 = vunpack.c.l.b16 %v202
      %v311 = vunpack.c.l.b16 %v203
      %v312 = vunpack.c.l.b16 %v204
      %v313 = vunpack.c.l.b16 %v205
      %v314 = vunpack.c.l.b16 %v206
      %v315 = vunpack.c.l.b16 %v207
      %v316 = vunpack.c.l.b16 %v208
      %v317 = vunpack.c.l.b16 %v209
      %v318 = vunpack.c.l.b16 %v210
      %v319 = vunpack.c.l.b16 %v211
      %v320 = vunpack.c.l.b16 %v212
      %v321 = vunpack.c.l.b16 %v213
      %v322 = vunpack.c.l.b16 %v214
      %v323 = vunpack.c.l.b16 %v215
      %v324 = vunpack.c.l.b16 %v216
      %v325 = vunpack.c.l.b16 %v217
      %v326 = vunpack.c.l.b16 %v218
      %v327 = vunpack.c.l.b16 %v219
      %v328 = vunpack.c.l.b16 %v220
      %v329 = vunpack.c.l.b16 %v221
      %v330 = vunpack.c.l.b16 %v222
      %v331 = vpack.c.b16 %v295, %v294
      %v332 = vpack.c.b16 %v297, %v296
      %v333 = vpack.c.b16 %v299, %v298
      %v334 = vpack.c.b16 %v301, %v300
      %v335 = vpack.c.b16 %v303, %v302
      %v336 = vpack.c.b16 %v305, %v304
      %v337 = vpack.c.b16 %v307, %v306
      %v338 = vpack.c.b16 %v309, %v308
      %v339 = vpack.c.b16 %v311, %v310
      %v340 = vpack.c.b16 %v313, %v312
      %v341 = vpack.c.b16 %v315, %v314
      %v342 = vpack.c.b16 %v317, %v316
      %v343 = vpack.c.b16 %v319, %v318
      %v344 = vpack.c.b16 %v321, %v320
      %v345 = vpack.c.b16 %v323, %v322
      %v346 = vpack.c.b16 %v325, %v324
      %v347 = vpack.c.b16 %v327, %v326
      %v348 = vpack.c.b16 %v329, %v328
      %v349 = vpack.c.b16 %v330, %v330
      %vm368 = vcmask 310272
      %v370 = vsel %vm368, %v249, 0
      %v373 = vsel %vm368, %v252, 0
      %vm375 = vcmask 1042432
      %v377 = vsel %vm375, %v349, 0
      %379 = vmatpush.bf16.msra.mxu0 %v338
      %380 = vmatpush.bf16.msra.mxu0 %v337
      %381 = vmatpush.bf16.msra.mxu0 %v336
      %382 = vmatpush.bf16.msra.mxu0 %v335
      %383 = vmatpush.bf16.msra.mxu0 %v334
      %384 = vmatpush.bf16.msra.mxu0 %v333
      %385 = vmatpush.bf16.msra.mxu0 %v332
      %386 = vmatpush.bf16.msra.mxu0 %v331
      %387 = vmatmul.bf16.gmra.mxu0 %v247
      %v388 = vpop.f32.mrf.mxu0
      %v389 = vadd.f32 %v225, %v388
      %v390 = vpop.f32.mrf.mxu0
      %v391 = vadd.f32 %v225, %v390
      %392 = vmatmul.bf16.gmra.mxu0 %v250
      %v393 = vpop.f32.mrf.mxu0
      %v394 = vadd.f32 %v225, %v393
      %v395 = vpop.f32.mrf.mxu0
      %v396 = vadd.f32 %v225, %v395
      %397 = vdwg.mxu0
      %398 = vmatpush.bf16.msra.mxu0 %v346
      %399 = vmatpush.bf16.msra.mxu0 %v345
      %400 = vmatpush.bf16.msra.mxu0 %v344
      %401 = vmatpush.bf16.msra.mxu0 %v343
      %402 = vmatpush.bf16.msra.mxu0 %v342
      %403 = vmatpush.bf16.msra.mxu0 %v341
      %404 = vmatpush.bf16.msra.mxu0 %v340
      %405 = vmatpush.bf16.msra.mxu0 %v339
      %406 = vmatmul.bf16.gmra.mxu0 %v248
      %v407 = vpop.f32.mrf.mxu0
      %v408 = vadd.f32 %v389, %v407
      %v409 = vpop.f32.mrf.mxu0
      %v410 = vadd.f32 %v391, %v409
      %411 = vmatmul.bf16.gmra.mxu0 %v251
      %v412 = vpop.f32.mrf.mxu0
      %v413 = vadd.f32 %v394, %v412
      %v414 = vpop.f32.mrf.mxu0
      %v415 = vadd.f32 %v396, %v414
      %416 = vdwg.mxu0
      %417 = vmatpush.bf16.msra.mxu0 0
      %418 = vmatpush.bf16.msra.mxu0 0
      %419 = vmatpush.bf16.msra.mxu0 0
      %420 = vmatpush.bf16.msra.mxu0 0
      %421 = vmatpush.bf16.msra.mxu0 0
      %422 = vmatpush.bf16.msra.mxu0 %v377
      %423 = vmatpush.bf16.msra.mxu0 %v348
      %424 = vmatpush.bf16.msra.mxu0 %v347
      %425 = vmatmul.bf16.gmra.mxu0 %v370
      %v426 = vpop.f32.mrf.mxu0
      %v427 = vadd.f32 %v408, %v426
      %v428 = vpop.f32.mrf.mxu0
      %v429 = vadd.f32 %v410, %v428
      %430 = vmatmul.bf16.gmra.mxu0 %v373
      %v431 = vpop.f32.mrf.mxu0
      %v432 = vadd.f32 %v413, %v431
      %v433 = vpop.f32.mrf.mxu0
      %v434 = vadd.f32 %v415, %v433
      %435 = vdwg.mxu0
      %v436 = vmax.f32 %v427, 0.0
      %v437 = vmax.f32 %v429, 0.0
      %v438 = vmax.f32 %v432, 0.0
      %v439 = vmax.f32 %v434, 0.0
      %v440 = vpack.c.bf16 %v436, %v436
      %v441 = vpack.c.bf16 %v437, %v437
      %v442 = vpack.c.bf16 %v438, %v438
      %v443 = vpack.c.bf16 %v439, %v439
      %444 = vst [vmem:[%s175] sm:$0xf] %v440
      %445 = vst [vmem:[%s175 + $0x4] sm:$0xf] %v441
      %446 = vst [vmem:[%s175 + $0x8] sm:$0xf] %v442
      %447 = vst [vmem:[%s175 + $0xc] sm:$0xf] %v443
      %s448 = smul.u32 4, %s14
      %p449 = scmp.lt.s32.totalorder %s448, 7
      %s450 = scalar_select %p449, %s448, 7
      %s451 = smul.addr %s450, 4
      %s452 = scalar_lea.vmem %s3, %s451
      // Predicated region
      $region33: #{visible_module_forward.2} parent=31 // pred_check
        %p453 = pneg %p100
      $region34: #{visible_module_forward.2} parent=31 // pred_check_branch
        %455 = sbr.rel (%p453) target = $region36
      $region35: #{visible_module_forward.2} parent=31 // pred_region
        %s456 = smul.u32 4, %s14
      $region36: #{visible_module_forward.2} parent=31 // pred_fallthru
        _
    $region32: #{visible_module_forward.2} parent=5 // pred_fallthru
      _
    %p457 = scmp.le.s32.totalorder 2, %s9
    // Predicated region
    $region37: #{visible_module_forward.2} parent=5 // pred_check
      %p458 = pneg %p457
    $region38: #{visible_module_forward.2} parent=5 // pred_check_branch
      %460 = sbr.rel (%p458) target = $region40
    $region39: #{visible_module_forward.2} parent=5 // pred_region
      %s461 = ssub.s32 %s9, 2
      // Predicated region
      $region41: #{visible_module_forward.2} parent=39 // pred_check
        %p462 = pneg %p106
      $region42: #{visible_module_forward.2} parent=39 // pred_check_branch
        %464 = sbr.rel (%p462) target = $region44
      $region43: #{visible_module_forward.2} parent=39 // pred_region
        %s465 = smul.u32 4, %s15
        %p466 = scmp.lt.s32.totalorder %s465, 7
        %s467 = scalar_select %p466, %s465, 7
        %s468 = smul.addr %s467, 4
        %s469 = scalar_lea.vmem %s3, %s468
      $region44: #{visible_module_forward.2} parent=39 // pred_fallthru
        _
    $region40: #{visible_module_forward.2} parent=5 // pred_fallthru
      _
  $region6: #{visible_module_forward.2} parent=0 // loop_footer
    %s13 = sadd.s32 1, %s9
  $region7: #{visible_module_forward.2} parent=0 // loop_footer_branch
    %8 = sbr.rel target = $region3
  $region8: #{visible_module_forward.2} parent=0 // loop_exit
    _

</llo_original>
